<compile_context>
chip_gen: v5e
topology: v5e:2x2
jax: 0.10.0
libtpu: 0.0.40
codegen_flags: <defaults>
</compile_context>

<pallas_src>
import functools

import jax
import jax.numpy as jnp
from jax.experimental import pallas as pl
from jax.experimental.pallas import tpu as pltpu


# ---------------------------------------------------------------------------
# Deterministic parameter initialisation (mimics the PyTorch module's init:
# xavier_uniform for decoder weights, orthogonal * 0.001 for the heads,
# zero biases).  Weights are produced already transposed to [in, out].
# ---------------------------------------------------------------------------
def _orthogonal(key, rows, cols):
    big = max(rows, cols)
    a = jax.random.normal(key, (big, big), dtype=jnp.float32)
    q, r = jnp.linalg.qr(a)
    d = jnp.diag(r)
    q = q * jnp.where(d >= 0, 1.0, -1.0)[None, :]
    return q[:rows, :cols]


def _xavier_uniform(key, fan_in, fan_out):
    limit = jnp.sqrt(6.0 / (fan_in + fan_out))
    return jax.random.uniform(
        key, (fan_in, fan_out), dtype=jnp.float32, minval=-limit, maxval=limit
    )


def init_params(key, concat_dim, action_dim, hidden_units=(64, 64)):
    k1, k2, k3, k4 = jax.random.split(key, 4)
    h1, h2 = hidden_units
    return {
        # decoder (xavier_uniform overrides the orthogonal init in PyTorch)
        "w1": _xavier_uniform(k1, concat_dim, h1),          # [in, out]
        "b1": jnp.zeros((1, h1), jnp.float32),
        "w2": _xavier_uniform(k2, h1, h2),
        "b2": jnp.zeros((1, h2), jnp.float32),
        # heads: orthogonal * 0.001  (PyTorch weight is [out,in]; transpose)
        "wm": (_orthogonal(k3, action_dim, h2) * 0.001).T,  # [h2, action_dim]
        "bm": jnp.zeros((1, action_dim), jnp.float32),
        "ws": (_orthogonal(k4, action_dim, h2) * 0.001).T,
        "bs": jnp.zeros((1, action_dim), jnp.float32),
    }


# ---------------------------------------------------------------------------
# Pallas kernel: whole MLP (2 ReLU layers + one fused head matmul) per batch tile.
# Matmul operands arrive in bf16 (or f32); accumulation is always fp32.
# ---------------------------------------------------------------------------
def _doe_kernel(obs_ref, w1_ref, b1_ref, w2_ref, b2_ref, wh_ref, bh_ref,
                heads_ref):
    h = jnp.dot(obs_ref[...], w1_ref[...], preferred_element_type=jnp.float32)
    h = jnp.maximum(h + b1_ref[...], 0.0)
    h = jnp.dot(h.astype(w2_ref.dtype), w2_ref[...],
                preferred_element_type=jnp.float32)
    h = jnp.maximum(h + b2_ref[...], 0.0)
    # fused heads: [tile, 2*action_dim]  (mean | log_std)
    heads_ref[...] = (
        jnp.dot(h.astype(wh_ref.dtype), wh_ref[...],
                preferred_element_type=jnp.float32)
        + bh_ref[...]
    )


def _round_up(x, m):
    return ((x + m - 1) // m) * m


@functools.partial(jax.jit, static_argnames=("batch_tile", "use_bf16"))
def doe_single_trans_action_net(obs, params, *, batch_tile=512, use_bf16=True):
    B, concat_dim = obs.shape
    h1 = params["w1"].shape[1]
    h2 = params["w2"].shape[1]
    action_dim = params["wm"].shape[1]

    # ---- fuse the two heads into a single [h2, 2*action_dim] matmul ----
    wh = jnp.concatenate([params["wm"], params["ws"]], axis=1)   # [h2, 2A]
    bh = jnp.concatenate([params["bm"], params["bs"]], axis=1)   # [1, 2A]

    # ---- cast MXU operands to bf16 (fp32 accumulation preserves accuracy) ----
    cdtype = jnp.bfloat16 if use_bf16 else jnp.float32
    w1 = params["w1"].astype(cdtype)
    w2 = params["w2"].astype(cdtype)
    wh = wh.astype(cdtype)
    obs_c = obs.astype(cdtype)

    # ---- ragged batch: pick a tile, pad B up to a multiple of it ----
    tile = min(batch_tile, _round_up(B, 8))      # tile is always a multiple of 8
    B_pad = _round_up(B, tile)
    if B_pad != B:
        obs_c = jnp.pad(obs_c, ((0, B_pad - B), (0, 0)))

    grid = (B_pad // tile,)

    def bcast(shape):
        # full-array block, same block for every batch tile -> DMA'd once.
        return pl.BlockSpec(shape, lambda i: (0, 0))

    heads = pl.pallas_call(
        _doe_kernel,
        out_shape=jax.ShapeDtypeStruct((B_pad, 2 * action_dim), jnp.float32),
        grid_spec=pltpu.PrefetchScalarGridSpec(
            num_scalar_prefetch=0,
            grid=grid,
            in_specs=[
                pl.BlockSpec((tile, concat_dim), lambda i: (i, 0)),
                bcast((concat_dim, h1)), bcast((1, h1)),
                bcast((h1, h2)),         bcast((1, h2)),
                bcast((h2, 2 * action_dim)), bcast((1, 2 * action_dim)),
            ],
            out_specs=pl.BlockSpec((tile, 2 * action_dim), lambda i: (i, 0)),
        ),
        compiler_params=pltpu.CompilerParams(
            dimension_semantics=("parallel",)   # batch tiles shard across TCs (v7x)
        ),
    )(obs_c, w1, params["b1"], w2, params["b2"], wh, bh)

    mean = heads[:B, :action_dim]
    log_std = heads[:B, action_dim:]
    return mean, log_std


# ---------------------------------------------------------------------------
# References for correctness checks.
# ---------------------------------------------------------------------------
def _reference_fp32(obs, p):
    h = jnp.maximum(obs @ p["w1"] + p["b1"], 0.0)
    h = jnp.maximum(h @ p["w2"] + p["b2"], 0.0)
    return h @ p["wm"] + p["bm"], h @ p["ws"] + p["bs"]


def _reference_mixed(obs, p, use_bf16=True):
    # Mirrors the kernel's exact casting (bf16 MXU operands, fp32 accumulate).
    cdtype = jnp.bfloat16 if use_bf16 else jnp.float32
    w1 = p["w1"].astype(cdtype)
    w2 = p["w2"].astype(cdtype)
    wm = p["wm"].astype(cdtype)
    ws = p["ws"].astype(cdtype)
    x = obs.astype(cdtype)
    h = jnp.maximum(
        jnp.dot(x, w1, preferred_element_type=jnp.float32) + p["b1"], 0.0)
    h = jnp.maximum(
        jnp.dot(h.astype(cdtype), w2, preferred_element_type=jnp.float32) + p["b2"],
        0.0)
    mean = jnp.dot(h.astype(cdtype), wm, preferred_element_type=jnp.float32) + p["bm"]
    log_std = jnp.dot(h.astype(cdtype), ws, preferred_element_type=jnp.float32) + p["bs"]
    return mean, log_std


if __name__ == "__main__":
    concat_dim, action_dim = 32, 8
    hidden_units = (64, 64)

    key = jax.random.PRNGKey(0)
    k_obs, k_params, k_big = jax.random.split(key, 3)
    params = init_params(k_params, concat_dim, action_dim, hidden_units)

    # --- small batch (grid of 1 tile) ---
    batch = 8
    obs = jax.random.normal(k_obs, (batch, concat_dim), dtype=jnp.float32)
    mean, log_std = doe_single_trans_action_net(obs, params)
    jax.block_until_ready((mean, log_std))

    ref_m, ref_s = _reference_mixed(obs, params)
    assert jnp.allclose(mean, ref_m, atol=1e-4, rtol=1e-4)
    assert jnp.allclose(log_std, ref_s, atol=1e-4, rtol=1e-4)
    fm, fs = _reference_fp32(obs, params)
    assert jnp.allclose(mean, fm, atol=5e-4, rtol=5e-2)
    assert jnp.allclose(log_std, fs, atol=5e-4, rtol=5e-2)
    assert mean.shape == (batch, action_dim) and log_std.shape == (batch, action_dim)

    # --- larger ragged batch (exercises padding + multi-step parallel grid) ---
    big_batch = 1000                      # not a multiple of the 512-row tile
    obs_big = jax.random.normal(k_big, (big_batch, concat_dim), dtype=jnp.float32)
    mean_b, log_std_b = doe_single_trans_action_net(obs_big, params)
    jax.block_until_ready((mean_b, log_std_b))

    ref_mb, ref_sb = _reference_mixed(obs_big, params)
    assert jnp.allclose(mean_b, ref_mb, atol=1e-4, rtol=1e-4)
    assert jnp.allclose(log_std_b, ref_sb, atol=1e-4, rtol=1e-4)
    assert mean_b.shape == (big_batch, action_dim)
    assert log_std_b.shape == (big_batch, action_dim)

    print("KERNEL_OK")
</pallas_src>

<mosaic_0001>
module attributes {stable_mosaic.version = 11 : i64} {
  func.func @_doe_kernel(%arg0: i32, %arg1: memref<8x32xbf16, #tpu.memory_space<vmem>>, %arg2: memref<32x64xbf16, #tpu.memory_space<vmem>>, %arg3: memref<1x64xf32, #tpu.memory_space<vmem>>, %arg4: memref<64x64xbf16, #tpu.memory_space<vmem>>, %arg5: memref<1x64xf32, #tpu.memory_space<vmem>>, %arg6: memref<64x16xbf16, #tpu.memory_space<vmem>>, %arg7: memref<1x16xf32, #tpu.memory_space<vmem>>, %arg8: memref<8x16xf32, #tpu.memory_space<vmem>>) attributes {dimension_semantics = [#tpu.dimension_semantics<parallel>], iteration_bounds = array<i64: 1>, scalar_prefetch = 0 : i64, scratch_operands = 0 : i64, tpu.core_type = #tpu.core_type<tc>, window_params = [{transform_indices = @transform_0, window_bounds = array<i64: 8, 32>}, {pipeline_mode = #tpu.pipeline_mode<synchronous>, transform_indices = @transform_1, window_bounds = array<i64: 32, 64>}, {pipeline_mode = #tpu.pipeline_mode<synchronous>, transform_indices = @transform_2, window_bounds = array<i64: 1, 64>}, {pipeline_mode = #tpu.pipeline_mode<synchronous>, transform_indices = @transform_3, window_bounds = array<i64: 64, 64>}, {pipeline_mode = #tpu.pipeline_mode<synchronous>, transform_indices = @transform_4, window_bounds = array<i64: 1, 64>}, {pipeline_mode = #tpu.pipeline_mode<synchronous>, transform_indices = @transform_5, window_bounds = array<i64: 64, 16>}, {pipeline_mode = #tpu.pipeline_mode<synchronous>, transform_indices = @transform_6, window_bounds = array<i64: 1, 16>}, {transform_indices = @transform_7, window_bounds = array<i64: 8, 16>}]} {
    %c0 = arith.constant 0 : index
    %c0_0 = arith.constant 0 : index
    %0 = vector.load %arg1[%c0, %c0_0] : memref<8x32xbf16, #tpu.memory_space<vmem>>, vector<8x32xbf16>
    %c0_1 = arith.constant 0 : index
    %c0_2 = arith.constant 0 : index
    %1 = vector.load %arg2[%c0_1, %c0_2] : memref<32x64xbf16, #tpu.memory_space<vmem>>, vector<32x64xbf16>
    %cst = arith.constant dense<0.000000e+00> : vector<8x64xf32>
    %2 = tpu.matmul %0, %1, %cst {dimension_numbers = #tpu.dot_dimension_numbers<[1], [0], [0], [1], [0, 0, 1, 1], [], []>} : vector<8x32xbf16>, vector<32x64xbf16>, vector<8x64xf32> -> vector<8x64xf32>
    %c0_3 = arith.constant 0 : index
    %c0_4 = arith.constant 0 : index
    %3 = vector.load %arg3[%c0_3, %c0_4] : memref<1x64xf32, #tpu.memory_space<vmem>>, vector<1x64xf32>
    %4 = vector.broadcast %3 : vector<1x64xf32> to vector<8x64xf32>
    %5 = arith.addf %2, %4 : vector<8x64xf32>
    %cst_5 = arith.constant 0.000000e+00 : f32
    %6 = vector.broadcast %cst_5 : f32 to vector<8x64xf32>
    %7 = arith.maximumf %5, %6 : vector<8x64xf32>
    %8 = arith.truncf %7 : vector<8x64xf32> to vector<8x64xbf16>
    %c0_6 = arith.constant 0 : index
    %c0_7 = arith.constant 0 : index
    %9 = vector.load %arg4[%c0_6, %c0_7] : memref<64x64xbf16, #tpu.memory_space<vmem>>, vector<64x64xbf16>
    %cst_8 = arith.constant dense<0.000000e+00> : vector<8x64xf32>
    %10 = tpu.matmul %8, %9, %cst_8 {dimension_numbers = #tpu.dot_dimension_numbers<[1], [0], [0], [1], [0, 0, 1, 1], [], []>} : vector<8x64xbf16>, vector<64x64xbf16>, vector<8x64xf32> -> vector<8x64xf32>
    %c0_9 = arith.constant 0 : index
    %c0_10 = arith.constant 0 : index
    %11 = vector.load %arg5[%c0_9, %c0_10] : memref<1x64xf32, #tpu.memory_space<vmem>>, vector<1x64xf32>
    %12 = vector.broadcast %11 : vector<1x64xf32> to vector<8x64xf32>
    %13 = arith.addf %10, %12 : vector<8x64xf32>
    %cst_11 = arith.constant 0.000000e+00 : f32
    %14 = vector.broadcast %cst_11 : f32 to vector<8x64xf32>
    %15 = arith.maximumf %13, %14 : vector<8x64xf32>
    %16 = arith.truncf %15 : vector<8x64xf32> to vector<8x64xbf16>
    %c0_12 = arith.constant 0 : index
    %c0_13 = arith.constant 0 : index
    %17 = vector.load %arg6[%c0_12, %c0_13] : memref<64x16xbf16, #tpu.memory_space<vmem>>, vector<64x16xbf16>
    %cst_14 = arith.constant dense<0.000000e+00> : vector<8x16xf32>
    %18 = tpu.matmul %16, %17, %cst_14 {dimension_numbers = #tpu.dot_dimension_numbers<[1], [0], [0], [1], [0, 0, 1, 1], [], []>} : vector<8x64xbf16>, vector<64x16xbf16>, vector<8x16xf32> -> vector<8x16xf32>
    %c0_15 = arith.constant 0 : index
    %c0_16 = arith.constant 0 : index
    %19 = vector.load %arg7[%c0_15, %c0_16] : memref<1x16xf32, #tpu.memory_space<vmem>>, vector<1x16xf32>
    %20 = vector.broadcast %19 : vector<1x16xf32> to vector<8x16xf32>
    %21 = arith.addf %18, %20 : vector<8x16xf32>
    %c0_17 = arith.constant 0 : index
    %c0_18 = arith.constant 0 : index
    %22 = vector.load %arg8[%c0_17, %c0_18] : memref<8x16xf32, #tpu.memory_space<vmem>>, vector<8x16xf32>
    tpu.vector_store %arg8[%c0_17, %c0_18], %21 {strides = array<i32>} : memref<8x16xf32, #tpu.memory_space<vmem>>, vector<8x16xf32>,
    return
  }
  func.func @transform_0(%arg0: i32) -> (i32, i32) {
    %c0_i32 = arith.constant 0 : i32
    %c0_i32_0 = arith.constant 0 : i32
    return %arg0, %c0_i32 : i32, i32
  }
  func.func @transform_1(%arg0: i32) -> (i32, i32) {
    %c0_i32 = arith.constant 0 : i32
    %c0_i32_0 = arith.constant 0 : i32
    %c0_i32_1 = arith.constant 0 : i32
    return %c0_i32, %c0_i32_0 : i32, i32
  }
  func.func @transform_2(%arg0: i32) -> (i32, i32) {
    %c0_i32 = arith.constant 0 : i32
    %c0_i32_0 = arith.constant 0 : i32
    %c0_i32_1 = arith.constant 0 : i32
    return %c0_i32, %c0_i32_0 : i32, i32
  }
  func.func @transform_3(%arg0: i32) -> (i32, i32) {
    %c0_i32 = arith.constant 0 : i32
    %c0_i32_0 = arith.constant 0 : i32
    %c0_i32_1 = arith.constant 0 : i32
    return %c0_i32, %c0_i32_0 : i32, i32
  }
  func.func @transform_4(%arg0: i32) -> (i32, i32) {
    %c0_i32 = arith.constant 0 : i32
    %c0_i32_0 = arith.constant 0 : i32
    %c0_i32_1 = arith.constant 0 : i32
    return %c0_i32, %c0_i32_0 : i32, i32
  }
  func.func @transform_5(%arg0: i32) -> (i32, i32) {
    %c0_i32 = arith.constant 0 : i32
    %c0_i32_0 = arith.constant 0 : i32
    %c0_i32_1 = arith.constant 0 : i32
    return %c0_i32, %c0_i32_0 : i32, i32
  }
  func.func @transform_6(%arg0: i32) -> (i32, i32) {
    %c0_i32 = arith.constant 0 : i32
    %c0_i32_0 = arith.constant 0 : i32
    %c0_i32_1 = arith.constant 0 : i32
    return %c0_i32, %c0_i32_0 : i32, i32
  }
  func.func @transform_7(%arg0: i32) -> (i32, i32) {
    %c0_i32 = arith.constant 0 : i32
    %c0_i32_0 = arith.constant 0 : i32
    return %arg0, %c0_i32 : i32, i32
  }
}

</mosaic_0001>

<llo_original>
// kernel: doe_single_trans_action_net.1
$region0: #{doe_single_trans_action_net.1}
  #allocation0 [shape = 'u32[]', space=smem, size = 0x4, offset = 0x4, fixed_abs, tag = 'smem constant byte address 0x4 - core index']
  #allocation1 [shape = 'u32[72,128]{1,0:T(1,128)}', space=vmem, size = 0x9000, scoped, tag = 'internal scratch']
  %s0 = inlined_call_operand.vmem [shape: bf16[8,32], index: 0, kind: input, shape index: {}]
  %s1 = inlined_call_operand.vmem [shape: bf16[32,64], index: 1, kind: input, shape index: {}]
  %s2 = inlined_call_operand.vmem [shape: f32[1,64], index: 2, kind: input, shape index: {}]
  %s3 = inlined_call_operand.vmem [shape: bf16[64,64], index: 3, kind: input, shape index: {}]
  %s4 = inlined_call_operand.vmem [shape: f32[1,64], index: 4, kind: input, shape index: {}]
  %s5 = inlined_call_operand.vmem [shape: bf16[64,16], index: 5, kind: input, shape index: {}]
  %s6 = inlined_call_operand.vmem [shape: f32[1,16], index: 6, kind: input, shape index: {}]
  %s7 = inlined_call_operand.vmem [shape: f32[8,16], index: 7, kind: output, shape index: {}]
  %s8 = sld [smem:[#allocation0]]
  $region38: #{doe_single_trans_action_net.1} parent=0
    _
  %s10 = ssub.s32 1, %s8
  %s11 = scalar_select 0, %s10, %s8
  // Predicated region
  $region2: #{doe_single_trans_action_net.1} parent=0 // pred_check
    _
  $region3: #{doe_single_trans_action_net.1} parent=0 // pred_check_branch
    %13 = sbr.rel (0) target = $region5
  $region4: #{doe_single_trans_action_net.1} parent=0 // pred_region
    _
  $region5: #{doe_single_trans_action_net.1} parent=0 // pred_fallthru
    _
  // Predicated region
  $region6: #{doe_single_trans_action_net.1} parent=0 // pred_check
    _
  $region7: #{doe_single_trans_action_net.1} parent=0 // pred_check_branch
    %15 = sbr.rel (0) target = $region9
  $region8: #{doe_single_trans_action_net.1} parent=0 // pred_region
    _
  $region9: #{doe_single_trans_action_net.1} parent=0 // pred_fallthru
    _
  // Predicated region
  $region10: #{doe_single_trans_action_net.1} parent=0 // pred_check
    _
  $region11: #{doe_single_trans_action_net.1} parent=0 // pred_check_branch
    %17 = sbr.rel (0) target = $region13
  $region12: #{doe_single_trans_action_net.1} parent=0 // pred_region
    _
  $region13: #{doe_single_trans_action_net.1} parent=0 // pred_fallthru
    _
  // Predicated region
  $region14: #{doe_single_trans_action_net.1} parent=0 // pred_check
    _
  $region15: #{doe_single_trans_action_net.1} parent=0 // pred_check_branch
    %19 = sbr.rel (0) target = $region17
  $region16: #{doe_single_trans_action_net.1} parent=0 // pred_region
    _
  $region17: #{doe_single_trans_action_net.1} parent=0 // pred_fallthru
    _
  // Predicated region
  $region18: #{doe_single_trans_action_net.1} parent=0 // pred_check
    _
  $region19: #{doe_single_trans_action_net.1} parent=0 // pred_check_branch
    %21 = sbr.rel (0) target = $region21
  $region20: #{doe_single_trans_action_net.1} parent=0 // pred_region
    _
  $region21: #{doe_single_trans_action_net.1} parent=0 // pred_fallthru
    _
  // Predicated region
  $region22: #{doe_single_trans_action_net.1} parent=0 // pred_check
    _
  $region23: #{doe_single_trans_action_net.1} parent=0 // pred_check_branch
    %23 = sbr.rel (0) target = $region25
  $region24: #{doe_single_trans_action_net.1} parent=0 // pred_region
    _
  $region25: #{doe_single_trans_action_net.1} parent=0 // pred_fallthru
    _
  // Predicated region
  $region26: #{doe_single_trans_action_net.1} parent=0 // pred_check
    _
  $region27: #{doe_single_trans_action_net.1} parent=0 // pred_check_branch
    %25 = sbr.rel (0) target = $region29
  $region28: #{doe_single_trans_action_net.1} parent=0 // pred_region
    _
  $region29: #{doe_single_trans_action_net.1} parent=0 // pred_fallthru
    _
  %v27 = vld [vmem:[%s0] sm:$0xf]
  %v28 = vld [vmem:[%s1] sm:$0xf]
  %v29 = vld [vmem:[%s1 + $0x4] sm:$0xf]
  %v30 = vld [vmem:[%s1 + $0x8] sm:$0xf]
  %v31 = vld [vmem:[%s1 + $0xc] sm:$0xf]
  %v32 = vld [vmem:[%s2] sm:$0x1]
  %v34 = vperm.slane %v32, 0
  %v40 = vunpack.c.l.b16 %v28
  %v41 = vunpack.c.l.b16 %v29
  %v42 = vunpack.c.l.b16 %v30
  %v43 = vunpack.c.l.b16 %v31
  %v44 = vpack.c.b16 %v41, %v40
  %v45 = vpack.c.b16 %v43, %v42
  %vm48 = vcmask 261120
  %v50 = vsel %vm48, %v27, 0
  %52 = vmatpush.bf16.msra.mxu0 0
  %53 = vmatpush.bf16.msra.mxu0 0
  %54 = vmatpush.bf16.msra.mxu0 0
  %55 = vmatpush.bf16.msra.mxu0 0
  %56 = vmatpush.bf16.msra.mxu0 0
  %57 = vmatpush.bf16.msra.mxu0 0
  %58 = vmatpush.bf16.msra.mxu0 %v45
  %59 = vmatpush.bf16.msra.mxu0 %v44
  %60 = vmatmul.bf16.gmra.mxu0 %v50
  %v61 = vpop.f32.mrf.mxu0
  %v62 = vadd.f32 %v34, %v61
  %v63 = vpop.f32.mrf.mxu0
  %64 = vdwg.mxu0
  %v65 = vmax.f32 %v62, 0.0
  %v66 = vpack.c.bf16 %v65, %v65
  %v67 = vld [vmem:[%s3] sm:$0xf]
  %v68 = vld [vmem:[%s3 + $0x4] sm:$0xf]
  %v69 = vld [vmem:[%s3 + $0x8] sm:$0xf]
  %v70 = vld [vmem:[%s3 + $0xc] sm:$0xf]
  %v71 = vld [vmem:[%s3 + $0x10] sm:$0xf]
  %v72 = vld [vmem:[%s3 + $0x14] sm:$0xf]
  %v73 = vld [vmem:[%s3 + $0x18] sm:$0xf]
  %v74 = vld [vmem:[%s3 + $0x1c] sm:$0xf]
  %v75 = vld [vmem:[%s4] sm:$0x1]
  %v77 = vperm.slane %v75, 0
  %v87 = vunpack.c.l.b16 %v67
  %v88 = vunpack.c.l.b16 %v68
  %v89 = vunpack.c.l.b16 %v69
  %v90 = vunpack.c.l.b16 %v70
  %v91 = vunpack.c.l.b16 %v71
  %v92 = vunpack.c.l.b16 %v72
  %v93 = vunpack.c.l.b16 %v73
  %v94 = vunpack.c.l.b16 %v74
  %v95 = vpack.c.b16 %v88, %v87
  %v96 = vpack.c.b16 %v90, %v89
  %v97 = vpack.c.b16 %v92, %v91
  %v98 = vpack.c.b16 %v94, %v93
  %vm103 = vcmask 523264
  %v105 = vsel %vm103, %v66, 0
  %107 = vmatpush.bf16.msra.mxu0 0
  %108 = vmatpush.bf16.msra.mxu0 0
  %109 = vmatpush.bf16.msra.mxu0 0
  %110 = vmatpush.bf16.msra.mxu0 0
  %111 = vmatpush.bf16.msra.mxu0 %v98
  %112 = vmatpush.bf16.msra.mxu0 %v97
  %113 = vmatpush.bf16.msra.mxu0 %v96
  %114 = vmatpush.bf16.msra.mxu0 %v95
  %115 = vmatmul.bf16.gmra.mxu0 %v105
  %v116 = vpop.f32.mrf.mxu0
  %v117 = vadd.f32 %v77, %v116
  %v118 = vpop.f32.mrf.mxu0
  %119 = vdwg.mxu0
  %v120 = vmax.f32 %v117, 0.0
  %v121 = vpack.c.bf16 %v120, %v120
  %v122 = vld [vmem:[%s5] sm:$0xf]
  %v123 = vld [vmem:[%s5 + $0x4] sm:$0xf]
  %v124 = vld [vmem:[%s5 + $0x8] sm:$0xf]
  %v125 = vld [vmem:[%s5 + $0xc] sm:$0xf]
  %v126 = vld [vmem:[%s5 + $0x10] sm:$0xf]
  %v127 = vld [vmem:[%s5 + $0x14] sm:$0xf]
  %v128 = vld [vmem:[%s5 + $0x18] sm:$0xf]
  %v129 = vld [vmem:[%s5 + $0x1c] sm:$0xf]
  %v130 = vld [vmem:[%s6] sm:$0x1]
  %v132 = vperm.slane %v130, 0
  %v142 = vunpack.c.l.b16 %v122
  %v143 = vunpack.c.l.b16 %v123
  %v144 = vunpack.c.l.b16 %v124
  %v145 = vunpack.c.l.b16 %v125
  %v146 = vunpack.c.l.b16 %v126
  %v147 = vunpack.c.l.b16 %v127
  %v148 = vunpack.c.l.b16 %v128
  %v149 = vunpack.c.l.b16 %v129
  %v150 = vpack.c.b16 %v143, %v142
  %v151 = vpack.c.b16 %v145, %v144
  %v152 = vpack.c.b16 %v147, %v146
  %v153 = vpack.c.b16 %v149, %v148
  %v159 = vsel %vm103, %v121, 0
  %161 = vmatpush.bf16.msra.mxu0 0
  %162 = vmatpush.bf16.msra.mxu0 0
  %163 = vmatpush.bf16.msra.mxu0 0
  %164 = vmatpush.bf16.msra.mxu0 0
  %165 = vmatpush.bf16.msra.mxu0 %v153
  %166 = vmatpush.bf16.msra.mxu0 %v152
  %167 = vmatpush.bf16.msra.mxu0 %v151
  %168 = vmatpush.bf16.msra.mxu0 %v150
  %169 = vmatmul.bf16.gmra.mxu0 %v159
  %v170 = vpop.f32.mrf.mxu0
  %v171 = vadd.f32 %v132, %v170
  %v172 = vpop.f32.mrf.mxu0
  %173 = vdwg.mxu0
  %vm174 = vcmask 130048
  %175 = vst.msk [vmem:[%s7] sm:$0xff] %vm174, %v171
  // Predicated region
  $region30: #{doe_single_trans_action_net.1} parent=0 // pred_check
    _
  $region31: #{doe_single_trans_action_net.1} parent=0 // pred_check_branch
    %177 = sbr.rel (0) target = $region33
  $region32: #{doe_single_trans_action_net.1} parent=0 // pred_region
    _
  $region33: #{doe_single_trans_action_net.1} parent=0 // pred_fallthru
    _
  // Predicated region
  $region34: #{doe_single_trans_action_net.1} parent=0 // pred_check
    _
  $region35: #{doe_single_trans_action_net.1} parent=0 // pred_check_branch
    %179 = sbr.rel (0) target = $region37
  $region36: #{doe_single_trans_action_net.1} parent=0 // pred_region
    _
  $region37: #{doe_single_trans_action_net.1} parent=0 // pred_fallthru
    _

</llo_original>
